<compile_context>
chip_gen: v7x
topology: tpu7x:2x2x1
jax: 0.10.0
libtpu: 0.0.40
codegen_flags: <defaults>
</compile_context>

<pallas_src>
import functools

import jax
import jax.numpy as jnp
from jax import lax
from jax.experimental import pallas as pl
from jax.experimental.pallas import tpu as pltpu

_MXU_DT = jnp.bfloat16              # MXU operand dtype (f32 accumulation)
_NT = (((1,), (1,)), ((), ()))      # contract last dims of both operands


def _dot_nt(a, b):
    return lax.dot_general(a, b, _NT, preferred_element_type=jnp.float32)


def _dot(a, b):
    return jnp.dot(a, b, preferred_element_type=jnp.float32)


# ----------------------------------------------------------------------------
# tiling helpers
# ----------------------------------------------------------------------------
def _pick_tb(bt, cmax, p, byte_cap=1 << 20):
    """Frames per grid step: batch small frames, but keep >= 2 grid steps."""
    best = 1
    for d in range(1, bt + 1):
        if bt % d:
            continue
        if d * cmax * p * 4 > byte_cap:
            continue
        if bt >= 2 and bt // d < 2:
            continue
        best = d
    return best


def _pick_zblk(dz, c, p, row_cap=512, byte_cap=4 << 20):
    """z slices per splat matmul: fill the MXU rows within VMEM caps."""
    best = 1
    for d in range(1, dz + 1):
        if dz % d:
            continue
        if d * c > row_cap or d * c * p * 4 > byte_cap:
            continue
        best = d
    return best


def _pick_zblk_final(dz, c, p, row_cap=512, byte_cap=4 << 20):
    """Like _pick_zblk, but the z block is also an output-block dim, so it
    must be sublane aligned (multiple of 8) or cover the full Dz."""
    best = None
    for d in range(1, dz + 1):
        if dz % d:
            continue
        if d * c > row_cap or d * c * p * 4 > byte_cap:
            continue
        if d == dz or d % 8 == 0:
            best = d
    if best is None:
        for d in range(1, dz + 1):
            if dz % d == 0 and (d == dz or d % 8 == 0):
                best = d
                break
    return best if best is not None else dz


# ----------------------------------------------------------------------------
# softsplat('avg') / grid_sample(bilinear, border) -- separable, z-blocked
# ----------------------------------------------------------------------------
def _splat_target_coords(flow, w_in):
    """Target (x, z) coords of every source pixel.  Non-finite flow values are
    pushed far out of range so their bilinear weights are 0 (matches the CUDA
    softsplat isfinite skip)."""
    p_iota = lax.broadcasted_iota(jnp.int32, (1, flow.shape[1]), 1)
    tx = (p_iota % w_in).astype(jnp.float32) + flow[0:1, :]
    tz = (p_iota // w_in).astype(jnp.float32) + flow[1:2, :]
    fin = (jnp.abs(tx) < 3.0e38) & (jnp.abs(tz) < 3.0e38)
    far = jnp.float32(-1.0e6)
    return jnp.where(fin, tx, far), jnp.where(fin, tz, far)


def _splat_rows(feat, az, bxt, zblk, wout):
    """softsplat('avg') of feat onto a block of z rows -> (C, zblk, wout)."""
    c, p = feat.shape
    scaled = (feat[:, None, :] * az[None, :, :]).reshape(c * zblk, p)
    rows = _dot_nt(scaled.astype(_MXU_DT), bxt)           # (C*zblk, wout) f32
    norm = _dot_nt(az.astype(_MXU_DT), bxt)               # (zblk, wout)   f32
    inv = 1.0 / jnp.where(norm == 0.0, 1.0, norm)         # exact division
    return rows.reshape(c, zblk, wout) * inv[None, :, :]


def _splat_sample(feat, flow, grid, w_in, dz, wout, zblk):
    """grid_sample(softsplat(feat)) fused per z block; returns (C, P)."""
    c, p = feat.shape
    tx, tz = _splat_target_coords(flow, w_in)                           # (1, P)
    x_idx = lax.broadcasted_iota(jnp.int32, (wout, 1), 0).astype(jnp.float32)
    bxt = jnp.maximum(1.0 - jnp.abs(tx - x_idx), 0.0).astype(_MXU_DT)   # (wout, P)
    # grid_sample coords (align_corners=False; border padding == clip for bilinear).
    # NOTE: the module normalizes grids with (H-1)/(W-1)/(Dz-1) but samples with
    # default align_corners=False; mirrored faithfully.
    sx = jnp.clip(((grid[0:1, :] + 1.0) * wout - 1.0) * 0.5, 0.0, float(wout - 1))
    sz = jnp.clip(((grid[1:2, :] + 1.0) * dz - 1.0) * 0.5, 0.0, float(dz - 1))
    gxt = jnp.maximum(1.0 - jnp.abs(sx - x_idx), 0.0).astype(_MXU_DT)   # (wout, P)

    def zbody(zb, samp):
        z0 = zb * zblk
        z_idx = (z0 + lax.broadcasted_iota(jnp.int32, (zblk, 1), 0)
                 ).astype(jnp.float32)                                   # (zblk, 1)
        az = jnp.maximum(1.0 - jnp.abs(tz - z_idx), 0.0)                 # (zblk, P)
        gz = jnp.maximum(1.0 - jnp.abs(sz - z_idx), 0.0)                 # (zblk, P)
        rows = _splat_rows(feat, az, bxt, zblk, wout)                    # (C, zblk, wout)
        # gather back: one big matmul over x, then a weighted reduce over z.
        g = _dot(rows.reshape(c * zblk, wout).astype(_MXU_DT), gxt)      # (C*zblk, P)
        return samp + jnp.sum(g.reshape(c, zblk, p) * gz[None, :, :], axis=1)

    samp0 = jnp.zeros((c, p), jnp.float32)
    nz = dz // zblk
    if nz == 1:
        return zbody(0, samp0)
    return lax.fori_loop(0, nz, zbody, samp0)


# ----------------------------------------------------------------------------
# kernels
# ----------------------------------------------------------------------------
def _fcpos_block0_kernel(x_ref, wp_ref, bp_ref, w0_ref, b0_ref, w1_ref, b1_ref,
                         ws_ref, o_ref):
    wp, bp = wp_ref[...], bp_ref[...]
    w0, b0 = w0_ref[...], b0_ref[...]
    w1, b1 = w1_ref[...], b1_ref[...]
    ws = ws_ref[...]
    for t in range(x_ref.shape[0]):
        x = x_ref[t].astype(_MXU_DT)                                # (C, P)
        net = _dot(wp, x) + bp                                      # (2h, P)
        h0 = _dot(w0, jnp.maximum(net, 0.0).astype(_MXU_DT)) + b0   # (h, P)
        dx = _dot(w1, jnp.maximum(h0, 0.0).astype(_MXU_DT)) + b1    # (h, P)
        xs = _dot(ws, net.astype(_MXU_DT))                          # (h, P)
        o_ref[t] = xs + dx


def _linear_plane_kernel(x_ref, w_ref, b_ref, o_ref):
    w, b = w_ref[...], b_ref[...]
    for t in range(x_ref.shape[0]):
        o_ref[t] = _dot(w, x_ref[t].astype(_MXU_DT)) + b


def _update_block_kernel(net_ref, fg_ref, w0a_ref, w0b_ref, b0_ref, w1_ref,
                         b1_ref, wsa_ref, wsb_ref, o_ref, *, H, W, Dz, zblk):
    w0a, w0b, b0 = w0a_ref[...], w0b_ref[...], b0_ref[...]
    w1, b1 = w1_ref[...], b1_ref[...]
    wsa, wsb = wsa_ref[...], wsb_ref[...]
    for t in range(net_ref.shape[0]):
        net = net_ref[t]                                            # (h, P)
        fg = fg_ref[t]                                              # (8, P)
        samp = (_splat_sample(net, fg[0:2], fg[4:6], W, Dz, H, zblk)
                + _splat_sample(net, fg[2:4], fg[6:8], W, Dz, W, zblk))
        pooled = net + samp                                         # new net_plane
        # ResnetBlockFC on concat([net, pooled]) via split weights.
        h0 = (_dot(w0a, jnp.maximum(net, 0.0).astype(_MXU_DT))
              + _dot(w0b, jnp.maximum(pooled, 0.0).astype(_MXU_DT)) + b0)
        dx = _dot(w1, jnp.maximum(h0, 0.0).astype(_MXU_DT)) + b1
        xs = (_dot(wsa, net.astype(_MXU_DT))
              + _dot(wsb, pooled.astype(_MXU_DT)))
        o_ref[t] = xs + dx


def _final_splat_kernel(feat_ref, fg_ref, oyz_ref, oxz_ref, *, W_in, zblk):
    z0 = pl.program_id(1) * zblk
    h_out = oyz_ref.shape[-1]
    w_out = oxz_ref.shape[-1]
    z_idx = (z0 + lax.broadcasted_iota(jnp.int32, (zblk, 1), 0)
             ).astype(jnp.float32)
    for t in range(feat_ref.shape[0]):
        feat = feat_ref[t]                                          # (C, P)
        fg = fg_ref[t]
        for flow, wout, o_ref in ((fg[0:2], h_out, oyz_ref),
                                  (fg[2:4], w_out, oxz_ref)):
            tx, tz = _splat_target_coords(flow, W_in)
            x_idx = lax.broadcasted_iota(jnp.int32, (wout, 1), 0
                                         ).astype(jnp.float32)
            bxt = jnp.maximum(1.0 - jnp.abs(tx - x_idx), 0.0).astype(_MXU_DT)
            az = jnp.maximum(1.0 - jnp.abs(tz - z_idx), 0.0)
            o_ref[t] = _splat_rows(feat, az, bxt, zblk, wout)       # (C, zblk, wout)


# ----------------------------------------------------------------------------
# pallas_call wrappers
# ----------------------------------------------------------------------------
def _full_spec(*shape):
    return pl.BlockSpec(tuple(shape), lambda *_: (0,) * len(shape))


def _fcpos_block0_call(x, wp, bp, w0, b0, w1, b1, ws, tb):
    bt, c, p = x.shape
    f2h, hh, h = wp.shape[0], w0.shape[0], w1.shape[0]
    return pl.pallas_call(
        _fcpos_block0_kernel,
        out_shape=jax.ShapeDtypeStruct((bt, h, p), jnp.float32),
        grid=(bt // tb,),
        in_specs=[pl.BlockSpec((tb, c, p), lambda i: (i, 0, 0)),
                  _full_spec(f2h, c), _full_spec(f2h, 1),
                  _full_spec(hh, f2h), _full_spec(hh, 1),
                  _full_spec(h, hh), _full_spec(h, 1),
                  _full_spec(h, f2h)],
        out_specs=pl.BlockSpec((tb, h, p), lambda i: (i, 0, 0)),
        compiler_params=pltpu.CompilerParams(dimension_semantics=("parallel",)),
    )(x, wp, bp, w0, b0, w1, b1, ws)


def _linear_plane_call(x, w, b, tb):
    bt, cin, p = x.shape
    cout = w.shape[0]
    return pl.pallas_call(
        _linear_plane_kernel,
        out_shape=jax.ShapeDtypeStruct((bt, cout, p), jnp.float32),
        grid=(bt // tb,),
        in_specs=[pl.BlockSpec((tb, cin, p), lambda i: (i, 0, 0)),
                  _full_spec(cout, cin), _full_spec(cout, 1)],
        out_specs=pl.BlockSpec((tb, cout, p), lambda i: (i, 0, 0)),
        compiler_params=pltpu.CompilerParams(dimension_semantics=("parallel",)),
    )(x, w, b)


def _update_block_call(net, fg, w0a, w0b, b0, w1, b1, wsa, wsb, H, W, Dz,
                       zblk, tb):
    bt, h, p = net.shape
    hh = w0a.shape[0]
    kern = functools.partial(_update_block_kernel, H=H, W=W, Dz=Dz, zblk=zblk)
    return pl.pallas_call(
        kern,
        out_shape=jax.ShapeDtypeStruct((bt, h, p), jnp.float32),
        grid=(bt // tb,),
        in_specs=[pl.BlockSpec((tb, h, p), lambda i: (i, 0, 0)),
                  pl.BlockSpec((tb, 8, p), lambda i: (i, 0, 0)),
                  _full_spec(hh, h), _full_spec(hh, h), _full_spec(hh, 1),
                  _full_spec(h, hh), _full_spec(h, 1),
                  _full_spec(h, h), _full_spec(h, h)],
        out_specs=pl.BlockSpec((tb, h, p), lambda i: (i, 0, 0)),
        compiler_params=pltpu.CompilerParams(dimension_semantics=("parallel",)),
    )(net, fg, w0a, w0b, b0, w1, b1, wsa, wsb)


def _final_splat_call(feat, fg, H, W, Dz, zblk, tb):
    bt, c, p = feat.shape
    nz = Dz // zblk
    kern = functools.partial(_final_splat_kernel, W_in=W, zblk=zblk)
    return pl.pallas_call(
        kern,
        out_shape=(jax.ShapeDtypeStruct((bt, c, Dz, H), jnp.float32),
                   jax.ShapeDtypeStruct((bt, c, Dz, W), jnp.float32)),
        grid=(bt // tb, nz),
        in_specs=[pl.BlockSpec((tb, c, p), lambda i, zb: (i, 0, 0)),
                  pl.BlockSpec((tb, 8, p), lambda i, zb: (i, 0, 0))],
        out_specs=(pl.BlockSpec((tb, c, zblk, H), lambda i, zb: (i, 0, zb, 0)),
                   pl.BlockSpec((tb, c, zblk, W), lambda i, zb: (i, 0, zb, 0))),
        compiler_params=pltpu.CompilerParams(
            dimension_semantics=("parallel", "arbitrary")),
    )(feat, fg)


# ----------------------------------------------------------------------------
# forward pass
# ----------------------------------------------------------------------------
def local_soft_splat_forward(params, img_feat, Fxy2xz, Fxy2yz, Dz, gridxy,
                             n_blocks=4):
    B, T, C, H, W = img_feat.shape
    # The reference module's pooled-rearrange only type-checks for B == 1.
    assert B == 1
    BT, P = B * T, H * W

    hidden = params['fc_c']['w'].shape[1]
    c_dim = params['fc_c']['w'].shape[0]

    # '(b t) c (h w)' plane layout for the whole chain.
    feat_plane = img_feat.reshape(BT, C, P).astype(jnp.float32)

    # grid normalization exactly as in the PyTorch forward.
    gyz = gridxy + Fxy2yz
    gxz = gridxy + Fxy2xz
    gyz = jnp.stack([(gyz[:, 0] / (H - 1) - 0.5) * 2.0,
                     (gyz[:, 1] / (Dz - 1) - 0.5) * 2.0], axis=1)
    gxz = jnp.stack([(gxz[:, 0] / (W - 1) - 0.5) * 2.0,
                     (gxz[:, 1] / (Dz - 1) - 0.5) * 2.0], axis=1)
    # pack flows + grids: one lane-dense (BT, 8, P) array (single DMA per step).
    fg = jnp.concatenate([Fxy2yz, Fxy2xz, gyz, gxz], axis=1)
    fg = fg.reshape(BT, 8, P).astype(jnp.float32)

    tb = _pick_tb(BT, max(C, 2 * hidden, c_dim), P)
    zblk_u = _pick_zblk(Dz, hidden, P)
    zblk_f = _pick_zblk_final(Dz, c_dim, P)

    bf = lambda a: a.astype(_MXU_DT)
    col = lambda b: b.reshape(-1, 1).astype(jnp.float32)

    bp0 = params['blocks'][0]
    net = _fcpos_block0_call(
        feat_plane,
        bf(params['fc_pos']['w']), col(params['fc_pos']['b']),
        bf(bp0['w0']), col(bp0['b0']), bf(bp0['w1']), col(bp0['b1']),
        bf(bp0['ws']), tb)

    for i in range(1, n_blocks):
        bp = params['blocks'][i]
        w0a, w0b = bp['w0'][:, :hidden], bp['w0'][:, hidden:]
        wsa, wsb = bp['ws'][:, :hidden], bp['ws'][:, hidden:]
        net = _update_block_call(net, fg, bf(w0a), bf(w0b), col(bp['b0']),
                                 bf(bp['w1']), col(bp['b1']),
                                 bf(wsa), bf(wsb), H, W, Dz, zblk_u, tb)

    c_plane = _linear_plane_call(net, bf(params['fc_c']['w']),
                                 col(params['fc_c']['b']), tb)

    yz, xz = _final_splat_call(c_plane, fg, H, W, Dz, zblk_f, tb)

    return (c_plane.reshape(BT, c_dim, H, W)[None],   # (1, BT, c_dim, H, W)
            yz[None],                                  # (1, BT, c_dim, Dz, H)
            xz[None])                                  # (1, BT, c_dim, Dz, W)


# ----------------------------------------------------------------------------
# Main
# ----------------------------------------------------------------------------
if __name__ == "__main__":
    key = jax.random.PRNGKey(0)
    B, T, C, H, W, Dz = 1, 4, 8, 8, 8, 8          # dim == C == 8
    hidden, c_dim, n_blocks = 16, 32, 4
    BT = B * T

    ks = jax.random.split(key, 24)

    def nrm(k, shape, s=0.1):
        return jax.random.normal(k, shape, jnp.float32) * s

    # Weights kept in PyTorch nn.Linear (out, in) layout so the plane kernels
    # apply W @ x directly.
    # NOTE(synk): the original __init__ zero-inits fc_1.weight; random values
    # are used so the synthetic test exercises every matmul.  The UNet built
    # in __init__ is never used by forward() and is therefore omitted.
    params = {
        'fc_pos': {'w': nrm(ks[0], (2 * hidden, C)), 'b': nrm(ks[1], (2 * hidden,))},
        'fc_c':   {'w': nrm(ks[2], (c_dim, hidden)), 'b': nrm(ks[3], (c_dim,))},
        'blocks': [],
    }
    for i in range(n_blocks):
        kk = jax.random.split(ks[4 + i], 5)
        params['blocks'].append({
            'w0': nrm(kk[0], (hidden, 2 * hidden)),   # fc_0: 2h -> h
            'b0': nrm(kk[1], (hidden,)),
            'w1': nrm(kk[2], (hidden, hidden)),       # fc_1: h -> h
            'b1': nrm(kk[3], (hidden,)),
            'ws': nrm(kk[4], (hidden, 2 * hidden)),   # shortcut: 2h -> h (no bias)
        })

    kin = jax.random.split(ks[20], 3)
    img_feat = jax.random.normal(kin[0], (B, T, C, H, W), jnp.float32)
    Fxy2yz = jax.random.normal(kin[1], (BT, 2, H, W), jnp.float32) * 2.0
    Fxy2xz = jax.random.normal(kin[2], (BT, 2, H, W), jnp.float32) * 2.0

    # base pixel grid (channel 0 = x, channel 1 = y), as used by the caller
    gx, gy = jnp.meshgrid(jnp.arange(W, dtype=jnp.float32),
                          jnp.arange(H, dtype=jnp.float32), indexing='xy')
    gridxy = jnp.broadcast_to(jnp.stack([gx, gy], 0)[None], (BT, 2, H, W))

    out_plane, out_yz, out_xz = local_soft_splat_forward(
        params, img_feat, Fxy2xz, Fxy2yz, Dz, gridxy, n_blocks=n_blocks)
    jax.block_until_ready((out_plane, out_yz, out_xz))

    assert out_plane.shape == (1, BT, c_dim, H, W)
    assert out_yz.shape == (1, BT, c_dim, Dz, H)
    assert out_xz.shape == (1, BT, c_dim, Dz, W)
    assert all(bool(jnp.isfinite(o).all()) for o in (out_plane, out_yz, out_xz))
    print("KERNEL_OK")
</pallas_src>

<mosaic_0001>
module attributes {stable_mosaic.version = 11 : i64} {
  func.func @_fcpos_block0_kernel(%arg0: i32, %arg1: memref<2x8x64xf32, #tpu.memory_space<vmem>>, %arg2: memref<32x8xbf16, #tpu.memory_space<vmem>>, %arg3: memref<32x1xf32, #tpu.memory_space<vmem>>, %arg4: memref<16x32xbf16, #tpu.memory_space<vmem>>, %arg5: memref<16x1xf32, #tpu.memory_space<vmem>>, %arg6: memref<16x16xbf16, #tpu.memory_space<vmem>>, %arg7: memref<16x1xf32, #tpu.memory_space<vmem>>, %arg8: memref<16x32xbf16, #tpu.memory_space<vmem>>, %arg9: memref<2x16x64xf32, #tpu.memory_space<vmem>>) attributes {dimension_semantics = [#tpu.dimension_semantics<parallel>], iteration_bounds = array<i64: 2>, scalar_prefetch = 0 : i64, scratch_operands = 0 : i64, tpu.core_type = #tpu.core_type<tc>, window_params = [{transform_indices = @transform_0, window_bounds = array<i64: 2, 8, 64>}, {pipeline_mode = #tpu.pipeline_mode<synchronous>, transform_indices = @transform_1, window_bounds = array<i64: 32, 8>}, {pipeline_mode = #tpu.pipeline_mode<synchronous>, transform_indices = @transform_2, window_bounds = array<i64: 32, 1>}, {pipeline_mode = #tpu.pipeline_mode<synchronous>, transform_indices = @transform_3, window_bounds = array<i64: 16, 32>}, {pipeline_mode = #tpu.pipeline_mode<synchronous>, transform_indices = @transform_4, window_bounds = array<i64: 16, 1>}, {pipeline_mode = #tpu.pipeline_mode<synchronous>, transform_indices = @transform_5, window_bounds = array<i64: 16, 16>}, {pipeline_mode = #tpu.pipeline_mode<synchronous>, transform_indices = @transform_6, window_bounds = array<i64: 16, 1>}, {pipeline_mode = #tpu.pipeline_mode<synchronous>, transform_indices = @transform_7, window_bounds = array<i64: 16, 32>}, {transform_indices = @transform_8, window_bounds = array<i64: 2, 16, 64>}]} {
    %c0 = arith.constant 0 : index
    %c0_0 = arith.constant 0 : index
    %0 = vector.load %arg2[%c0, %c0_0] : memref<32x8xbf16, #tpu.memory_space<vmem>>, vector<32x8xbf16>
    %c0_1 = arith.constant 0 : index
    %c0_2 = arith.constant 0 : index
    %1 = vector.load %arg3[%c0_1, %c0_2] : memref<32x1xf32, #tpu.memory_space<vmem>>, vector<32x1xf32>
    %c0_3 = arith.constant 0 : index
    %c0_4 = arith.constant 0 : index
    %2 = vector.load %arg4[%c0_3, %c0_4] : memref<16x32xbf16, #tpu.memory_space<vmem>>, vector<16x32xbf16>
    %c0_5 = arith.constant 0 : index
    %c0_6 = arith.constant 0 : index
    %3 = vector.load %arg5[%c0_5, %c0_6] : memref<16x1xf32, #tpu.memory_space<vmem>>, vector<16x1xf32>
    %c0_7 = arith.constant 0 : index
    %c0_8 = arith.constant 0 : index
    %4 = vector.load %arg6[%c0_7, %c0_8] : memref<16x16xbf16, #tpu.memory_space<vmem>>, vector<16x16xbf16>
    %c0_9 = arith.constant 0 : index
    %c0_10 = arith.constant 0 : index
    %5 = vector.load %arg7[%c0_9, %c0_10] : memref<16x1xf32, #tpu.memory_space<vmem>>, vector<16x1xf32>
    %c0_11 = arith.constant 0 : index
    %c0_12 = arith.constant 0 : index
    %6 = vector.load %arg8[%c0_11, %c0_12] : memref<16x32xbf16, #tpu.memory_space<vmem>>, vector<16x32xbf16>
    %c0_13 = arith.constant 0 : index
    %c0_14 = arith.constant 0 : index
    %c0_15 = arith.constant 0 : index
    %7 = vector.load %arg1[%c0_13, %c0_14, %c0_15] : memref<2x8x64xf32, #tpu.memory_space<vmem>>, vector<1x8x64xf32>
    %8 = vector.shape_cast %7 : vector<1x8x64xf32> to vector<8x64xf32>
    %9 = arith.truncf %8 : vector<8x64xf32> to vector<8x64xbf16>
    %cst = arith.constant dense<0.000000e+00> : vector<32x64xf32>
    %10 = tpu.matmul %0, %9, %cst {dimension_numbers = #tpu.dot_dimension_numbers<[1], [0], [0], [1], [0, 0, 1, 1], [], []>} : vector<32x8xbf16>, vector<8x64xbf16>, vector<32x64xf32> -> vector<32x64xf32>
    %11 = vector.broadcast %1 : vector<32x1xf32> to vector<32x64xf32>
    %12 = arith.addf %10, %11 : vector<32x64xf32>
    %cst_16 = arith.constant 0.000000e+00 : f32
    %13 = vector.broadcast %cst_16 : f32 to vector<32x64xf32>
    %14 = arith.maximumf %12, %13 : vector<32x64xf32>
    %15 = arith.truncf %14 : vector<32x64xf32> to vector<32x64xbf16>
    %cst_17 = arith.constant dense<0.000000e+00> : vector<16x64xf32>
    %16 = tpu.matmul %2, %15, %cst_17 {dimension_numbers = #tpu.dot_dimension_numbers<[1], [0], [0], [1], [0, 0, 1, 1], [], []>} : vector<16x32xbf16>, vector<32x64xbf16>, vector<16x64xf32> -> vector<16x64xf32>
    %17 = vector.broadcast %3 : vector<16x1xf32> to vector<16x64xf32>
    %18 = arith.addf %16, %17 : vector<16x64xf32>
    %cst_18 = arith.constant 0.000000e+00 : f32
    %19 = vector.broadcast %cst_18 : f32 to vector<16x64xf32>
    %20 = arith.maximumf %18, %19 : vector<16x64xf32>
    %21 = arith.truncf %20 : vector<16x64xf32> to vector<16x64xbf16>
    %cst_19 = arith.constant dense<0.000000e+00> : vector<16x64xf32>
    %22 = tpu.matmul %4, %21, %cst_19 {dimension_numbers = #tpu.dot_dimension_numbers<[1], [0], [0], [1], [0, 0, 1, 1], [], []>} : vector<16x16xbf16>, vector<16x64xbf16>, vector<16x64xf32> -> vector<16x64xf32>
    %23 = vector.broadcast %5 : vector<16x1xf32> to vector<16x64xf32>
    %24 = arith.addf %22, %23 : vector<16x64xf32>
    %25 = arith.truncf %12 : vector<32x64xf32> to vector<32x64xbf16>
    %cst_20 = arith.constant dense<0.000000e+00> : vector<16x64xf32>
    %26 = tpu.matmul %6, %25, %cst_20 {dimension_numbers = #tpu.dot_dimension_numbers<[1], [0], [0], [1], [0, 0, 1, 1], [], []>} : vector<16x32xbf16>, vector<32x64xbf16>, vector<16x64xf32> -> vector<16x64xf32>
    %27 = arith.addf %26, %24 : vector<16x64xf32>
    %c0_21 = arith.constant 0 : index
    %c0_22 = arith.constant 0 : index
    %c0_23 = arith.constant 0 : index
    %28 = vector.load %arg9[%c0_21, %c0_22, %c0_23] : memref<2x16x64xf32, #tpu.memory_space<vmem>>, vector<1x16x64xf32>
    %29 = vector.shape_cast %28 : vector<1x16x64xf32> to vector<16x64xf32>
    %30 = vector.shape_cast %27 : vector<16x64xf32> to vector<1x16x64xf32>
    tpu.vector_store %arg9[%c0_21, %c0_22, %c0_23], %30 {strides = array<i32>} : memref<2x16x64xf32, #tpu.memory_space<vmem>>, vector<1x16x64xf32>,
    %c1 = arith.constant 1 : index
    %c0_24 = arith.constant 0 : index
    %c0_25 = arith.constant 0 : index
    %31 = vector.load %arg1[%c1, %c0_24, %c0_25] : memref<2x8x64xf32, #tpu.memory_space<vmem>>, vector<1x8x64xf32>
    %32 = vector.shape_cast %31 : vector<1x8x64xf32> to vector<8x64xf32>
    %33 = arith.truncf %32 : vector<8x64xf32> to vector<8x64xbf16>
    %cst_26 = arith.constant dense<0.000000e+00> : vector<32x64xf32>
    %34 = tpu.matmul %0, %33, %cst_26 {dimension_numbers = #tpu.dot_dimension_numbers<[1], [0], [0], [1], [0, 0, 1, 1], [], []>} : vector<32x8xbf16>, vector<8x64xbf16>, vector<32x64xf32> -> vector<32x64xf32>
    %35 = vector.broadcast %1 : vector<32x1xf32> to vector<32x64xf32>
    %36 = arith.addf %34, %35 : vector<32x64xf32>
    %cst_27 = arith.constant 0.000000e+00 : f32
    %37 = vector.broadcast %cst_27 : f32 to vector<32x64xf32>
    %38 = arith.maximumf %36, %37 : vector<32x64xf32>
    %39 = arith.truncf %38 : vector<32x64xf32> to vector<32x64xbf16>
    %cst_28 = arith.constant dense<0.000000e+00> : vector<16x64xf32>
    %40 = tpu.matmul %2, %39, %cst_28 {dimension_numbers = #tpu.dot_dimension_numbers<[1], [0], [0], [1], [0, 0, 1, 1], [], []>} : vector<16x32xbf16>, vector<32x64xbf16>, vector<16x64xf32> -> vector<16x64xf32>
    %41 = vector.broadcast %3 : vector<16x1xf32> to vector<16x64xf32>
    %42 = arith.addf %40, %41 : vector<16x64xf32>
    %cst_29 = arith.constant 0.000000e+00 : f32
    %43 = vector.broadcast %cst_29 : f32 to vector<16x64xf32>
    %44 = arith.maximumf %42, %43 : vector<16x64xf32>
    %45 = arith.truncf %44 : vector<16x64xf32> to vector<16x64xbf16>
    %cst_30 = arith.constant dense<0.000000e+00> : vector<16x64xf32>
    %46 = tpu.matmul %4, %45, %cst_30 {dimension_numbers = #tpu.dot_dimension_numbers<[1], [0], [0], [1], [0, 0, 1, 1], [], []>} : vector<16x16xbf16>, vector<16x64xbf16>, vector<16x64xf32> -> vector<16x64xf32>
    %47 = vector.broadcast %5 : vector<16x1xf32> to vector<16x64xf32>
    %48 = arith.addf %46, %47 : vector<16x64xf32>
    %49 = arith.truncf %36 : vector<32x64xf32> to vector<32x64xbf16>
    %cst_31 = arith.constant dense<0.000000e+00> : vector<16x64xf32>
    %50 = tpu.matmul %6, %49, %cst_31 {dimension_numbers = #tpu.dot_dimension_numbers<[1], [0], [0], [1], [0, 0, 1, 1], [], []>} : vector<16x32xbf16>, vector<32x64xbf16>, vector<16x64xf32> -> vector<16x64xf32>
    %51 = arith.addf %50, %48 : vector<16x64xf32>
    %c1_32 = arith.constant 1 : index
    %c0_33 = arith.constant 0 : index
    %c0_34 = arith.constant 0 : index
    %52 = vector.load %arg9[%c1_32, %c0_33, %c0_34] : memref<2x16x64xf32, #tpu.memory_space<vmem>>, vector<1x16x64xf32>
    %53 = vector.shape_cast %52 : vector<1x16x64xf32> to vector<16x64xf32>
    %54 = vector.shape_cast %51 : vector<16x64xf32> to vector<1x16x64xf32>
    tpu.vector_store %arg9[%c1_32, %c0_33, %c0_34], %54 {strides = array<i32>} : memref<2x16x64xf32, #tpu.memory_space<vmem>>, vector<1x16x64xf32>,
    return
  }
  func.func @transform_0(%arg0: i32) -> (i32, i32, i32) {
    %c0_i32 = arith.constant 0 : i32
    %c0_i32_0 = arith.constant 0 : i32
    %c0_i32_1 = arith.constant 0 : i32
    return %arg0, %c0_i32, %c0_i32_0 : i32, i32, i32
  }
  func.func @transform_1(%arg0: i32) -> (i32, i32) {
    %c0_i32 = arith.constant 0 : i32
    %c0_i32_0 = arith.constant 0 : i32
    %c0_i32_1 = arith.constant 0 : i32
    return %c0_i32, %c0_i32_0 : i32, i32
  }
  func.func @transform_2(%arg0: i32) -> (i32, i32) {
    %c0_i32 = arith.constant 0 : i32
    %c0_i32_0 = arith.constant 0 : i32
    %c0_i32_1 = arith.constant 0 : i32
    return %c0_i32, %c0_i32_0 : i32, i32
  }
  func.func @transform_3(%arg0: i32) -> (i32, i32) {
    %c0_i32 = arith.constant 0 : i32
    %c0_i32_0 = arith.constant 0 : i32
    %c0_i32_1 = arith.constant 0 : i32
    return %c0_i32, %c0_i32_0 : i32, i32
  }
  func.func @transform_4(%arg0: i32) -> (i32, i32) {
    %c0_i32 = arith.constant 0 : i32
    %c0_i32_0 = arith.constant 0 : i32
    %c0_i32_1 = arith.constant 0 : i32
    return %c0_i32, %c0_i32_0 : i32, i32
  }
  func.func @transform_5(%arg0: i32) -> (i32, i32) {
    %c0_i32 = arith.constant 0 : i32
    %c0_i32_0 = arith.constant 0 : i32
    %c0_i32_1 = arith.constant 0 : i32
    return %c0_i32, %c0_i32_0 : i32, i32
  }
  func.func @transform_6(%arg0: i32) -> (i32, i32) {
    %c0_i32 = arith.constant 0 : i32
    %c0_i32_0 = arith.constant 0 : i32
    %c0_i32_1 = arith.constant 0 : i32
    return %c0_i32, %c0_i32_0 : i32, i32
  }
  func.func @transform_7(%arg0: i32) -> (i32, i32) {
    %c0_i32 = arith.constant 0 : i32
    %c0_i32_0 = arith.constant 0 : i32
    %c0_i32_1 = arith.constant 0 : i32
    return %c0_i32, %c0_i32_0 : i32, i32
  }
  func.func @transform_8(%arg0: i32) -> (i32, i32, i32) {
    %c0_i32 = arith.constant 0 : i32
    %c0_i32_0 = arith.constant 0 : i32
    %c0_i32_1 = arith.constant 0 : i32
    return %arg0, %c0_i32, %c0_i32_0 : i32, i32, i32
  }
}

</mosaic_0001>

<llo_original>
// kernel: tpu_custom_call.1
$region0: #{tpu_custom_call.1}
  #allocation0 [shape = 'u32[]', space=smem, size = 0x4, offset = 0x4, fixed_abs, tag = 'smem constant byte address 0x4 - core index']
  #allocation1 [shape = 'u32[144,128]{1,0:T(1,128)}', space=vmem, size = 0x12000, scoped, tag = 'internal scratch']
  %s0 = inlined_call_operand.vmem [shape: f32[4,8,64], index: 0, kind: input, shape index: {}]
  %s1 = inlined_call_operand.vmem [shape: bf16[32,8], index: 1, kind: input, shape index: {}]
  %s2 = inlined_call_operand.vmem [shape: f32[32,1], index: 2, kind: input, shape index: {}]
  %s3 = inlined_call_operand.vmem [shape: bf16[16,32], index: 3, kind: input, shape index: {}]
  %s4 = inlined_call_operand.vmem [shape: f32[16,1], index: 4, kind: input, shape index: {}]
  %s5 = inlined_call_operand.vmem [shape: bf16[16,16], index: 5, kind: input, shape index: {}]
  %s6 = inlined_call_operand.vmem [shape: f32[16,1], index: 6, kind: input, shape index: {}]
  %s7 = inlined_call_operand.vmem [shape: bf16[16,32], index: 7, kind: input, shape index: {}]
  %s8 = inlined_call_operand.hbm [shape: f32[4,16,64], index: 8, kind: output, shape index: {}]
  %s9 = sld [smem:[#allocation0]]
  $region65: #{tpu_custom_call.1} parent=0
    _
  %s11 = ssub.s32 1, %s9
  %s12 = scalar_select 0, %s11, %s9
  $region1: #{tpu_custom_call.1} parent=0
    #allocation2 [shape = 'u8[32768]{0}', space=vmem, size = 0x8000, scoped, tag = 'output window, operand 0']
    #allocation3 [shape = 's32[2]{0}', space=sflag, size = 0x8, scoped, tag = 'scoped memory for tpu_custom_call.1']
    %13 = vsyncpa [#allocation3], 0
    %s14 = scalar_lea.sflag [#allocation3], 1
    %15 = vsyncpa %s14, 0
    loop: start=0, step=1, limit=4
    $region2: #{tpu_custom_call.1} parent=1 // loop_pre_header
      _
    $region3: #{tpu_custom_call.1} parent=1 // loop_header
      %s17 = sphi 0, %s21
      %p18 = scmp.ge.s32.totalorder %s17, 4
      %s27 = sphi 0, %s29
      %s30 = sphi 0, %s27
      %s31 = sphi 0, %s30
      %s47 = sphi 0, %s31
      %s51 = sphi 0, %s51
      %s53 = sphi 0, %s51
      %s54 = sphi 0, %s53
      %s68 = sphi 0, %s54
      %s72 = sphi 0, %s72
      %s74 = sphi 0, %s72
      %s75 = sphi 0, %s74
      %s89 = sphi 0, %s75
      %s93 = sphi 0, %s93
      %s95 = sphi 0, %s93
      %s96 = sphi 0, %s95
      %s110 = sphi 0, %s96
      %s114 = sphi 0, %s114
      %s116 = sphi 0, %s114
      %s117 = sphi 0, %s116
      %s131 = sphi 0, %s117
      %s135 = sphi 0, %s135
      %s137 = sphi 0, %s135
      %s138 = sphi 0, %s137
      %s152 = sphi 0, %s138
      %s156 = sphi 0, %s156
      %s158 = sphi 0, %s156
      %s159 = sphi 0, %s158
      %s173 = sphi 0, %s159
      %s177 = sphi 0, %s177
      %s179 = sphi 0, %s177
      %s180 = sphi 0, %s179
      %s194 = sphi 0, %s180
      %s200 = sphi 0, %s202
      %s203 = sphi 0, %s200
      %s204 = sphi 0, %s203
      %s220 = sphi 0, %s204
    $region4: #{tpu_custom_call.1} parent=1 // loop_header_branch
      %20 = sbr.rel (%p18) target = $region8
    $region5: #{tpu_custom_call.1} parent=1 // loop_body
      %s22 = ssub.s32 %s17, 1
      %s23 = ssub.s32 %s17, 2
      %s24 = sadd.s32 %s17, 1
      %s25 = ssub.s32 %s17, %s24
      %p26 = scmp.eq.s32.totalorder %s25, 0
      %s28 = sadd.s32 %s27, 1
      %s29 = scalar_select %p26, %s27, %s28
      %p32 = pneg %p26
      %p33 = scmp.eq.s32.totalorder %s17, 1
      %p34 = por %p32, %p33
      %p35 = scmp.ne.s32.totalorder %s27, %s30
      %p36 = scmp.eq.s32.totalorder %s17, 0
      %p37 = por %p35, %p36
      %p38 = scmp.ne.s32.totalorder %s27, %s30
      %p39 = scmp.eq.s32.totalorder %s22, 1
      %p40 = por %p38, %p39
      %p41 = scmp.ne.s32.totalorder %s30, %s31
      %p42 = scmp.eq.s32.totalorder %s22, 0
      %p43 = por %p41, %p42
      %p44 = scmp.ne.s32.totalorder %s30, %s31
      %p45 = scmp.eq.s32.totalorder %s23, 1
      %p46 = por %p44, %p45
      %p48 = scmp.ne.s32.totalorder %s31, %s47
      %p49 = scmp.eq.s32.totalorder %s23, 0
      %p50 = por %p48, %p49
      %s52 = sadd.s32 %s51, 1
      %p55 = scmp.eq.s32.totalorder %s17, 1
      %p56 = scmp.ne.s32.totalorder %s51, %s53
      %p57 = scmp.eq.s32.totalorder %s17, 0
      %p58 = por %p56, %p57
      %p59 = scmp.ne.s32.totalorder %s51, %s53
      %p60 = scmp.eq.s32.totalorder %s22, 1
      %p61 = por %p59, %p60
      %p62 = scmp.ne.s32.totalorder %s53, %s54
      %p63 = scmp.eq.s32.totalorder %s22, 0
      %p64 = por %p62, %p63
      %p65 = scmp.ne.s32.totalorder %s53, %s54
      %p66 = scmp.eq.s32.totalorder %s23, 1
      %p67 = por %p65, %p66
      %p69 = scmp.ne.s32.totalorder %s54, %s68
      %p70 = scmp.eq.s32.totalorder %s23, 0
      %p71 = por %p69, %p70
      %s73 = sadd.s32 %s72, 1
      %p76 = scmp.eq.s32.totalorder %s17, 1
      %p77 = scmp.ne.s32.totalorder %s72, %s74
      %p78 = scmp.eq.s32.totalorder %s17, 0
      %p79 = por %p77, %p78
      %p80 = scmp.ne.s32.totalorder %s72, %s74
      %p81 = scmp.eq.s32.totalorder %s22, 1
      %p82 = por %p80, %p81
      %p83 = scmp.ne.s32.totalorder %s74, %s75
      %p84 = scmp.eq.s32.totalorder %s22, 0
      %p85 = por %p83, %p84
      %p86 = scmp.ne.s32.totalorder %s74, %s75
      %p87 = scmp.eq.s32.totalorder %s23, 1
      %p88 = por %p86, %p87
      %p90 = scmp.ne.s32.totalorder %s75, %s89
      %p91 = scmp.eq.s32.totalorder %s23, 0
      %p92 = por %p90, %p91
      %s94 = sadd.s32 %s93, 1
      %p97 = scmp.eq.s32.totalorder %s17, 1
      %p98 = scmp.ne.s32.totalorder %s93, %s95
      %p99 = scmp.eq.s32.totalorder %s17, 0
      %p100 = por %p98, %p99
      %p101 = scmp.ne.s32.totalorder %s93, %s95
      %p102 = scmp.eq.s32.totalorder %s22, 1
      %p103 = por %p101, %p102
      %p104 = scmp.ne.s32.totalorder %s95, %s96
      %p105 = scmp.eq.s32.totalorder %s22, 0
      %p106 = por %p104, %p105
      %p107 = scmp.ne.s32.totalorder %s95, %s96
      %p108 = scmp.eq.s32.totalorder %s23, 1
      %p109 = por %p107, %p108
      %p111 = scmp.ne.s32.totalorder %s96, %s110
      %p112 = scmp.eq.s32.totalorder %s23, 0
      %p113 = por %p111, %p112
      %s115 = sadd.s32 %s114, 1
      %p118 = scmp.eq.s32.totalorder %s17, 1
      %p119 = scmp.ne.s32.totalorder %s114, %s116
      %p120 = scmp.eq.s32.totalorder %s17, 0
      %p121 = por %p119, %p120
      %p122 = scmp.ne.s32.totalorder %s114, %s116
      %p123 = scmp.eq.s32.totalorder %s22, 1
      %p124 = por %p122, %p123
      %p125 = scmp.ne.s32.totalorder %s116, %s117
      %p126 = scmp.eq.s32.totalorder %s22, 0
      %p127 = por %p125, %p126
      %p128 = scmp.ne.s32.totalorder %s116, %s117
      %p129 = scmp.eq.s32.totalorder %s23, 1
      %p130 = por %p128, %p129
      %p132 = scmp.ne.s32.totalorder %s117, %s131
      %p133 = scmp.eq.s32.totalorder %s23, 0
      %p134 = por %p132, %p133
      %s136 = sadd.s32 %s135, 1
      %p139 = scmp.eq.s32.totalorder %s17, 1
      %p140 = scmp.ne.s32.totalorder %s135, %s137
      %p141 = scmp.eq.s32.totalorder %s17, 0
      %p142 = por %p140, %p141
      %p143 = scmp.ne.s32.totalorder %s135, %s137
      %p144 = scmp.eq.s32.totalorder %s22, 1
      %p145 = por %p143, %p144
      %p146 = scmp.ne.s32.totalorder %s137, %s138
      %p147 = scmp.eq.s32.totalorder %s22, 0
      %p148 = por %p146, %p147
      %p149 = scmp.ne.s32.totalorder %s137, %s138
      %p150 = scmp.eq.s32.totalorder %s23, 1
      %p151 = por %p149, %p150
      %p153 = scmp.ne.s32.totalorder %s138, %s152
      %p154 = scmp.eq.s32.totalorder %s23, 0
      %p155 = por %p153, %p154
      %s157 = sadd.s32 %s156, 1
      %p160 = scmp.eq.s32.totalorder %s17, 1
      %p161 = scmp.ne.s32.totalorder %s156, %s158
      %p162 = scmp.eq.s32.totalorder %s17, 0
      %p163 = por %p161, %p162
      %p164 = scmp.ne.s32.totalorder %s156, %s158
      %p165 = scmp.eq.s32.totalorder %s22, 1
      %p166 = por %p164, %p165
      %p167 = scmp.ne.s32.totalorder %s158, %s159
      %p168 = scmp.eq.s32.totalorder %s22, 0
      %p169 = por %p167, %p168
      %p170 = scmp.ne.s32.totalorder %s158, %s159
      %p171 = scmp.eq.s32.totalorder %s23, 1
      %p172 = por %p170, %p171
      %p174 = scmp.ne.s32.totalorder %s159, %s173
      %p175 = scmp.eq.s32.totalorder %s23, 0
      %p176 = por %p174, %p175
      %s178 = sadd.s32 %s177, 1
      %p181 = scmp.eq.s32.totalorder %s17, 1
      %p182 = scmp.ne.s32.totalorder %s177, %s179
      %p183 = scmp.eq.s32.totalorder %s17, 0
      %p184 = por %p182, %p183
      %p185 = scmp.ne.s32.totalorder %s177, %s179
      %p186 = scmp.eq.s32.totalorder %s22, 1
      %p187 = por %p185, %p186
      %p188 = scmp.ne.s32.totalorder %s179, %s180
      %p189 = scmp.eq.s32.totalorder %s22, 0
      %p190 = por %p188, %p189
      %p191 = scmp.ne.s32.totalorder %s179, %s180
      %p192 = scmp.eq.s32.totalorder %s23, 1
      %p193 = por %p191, %p192
      %p195 = scmp.ne.s32.totalorder %s180, %s194
      %p196 = scmp.eq.s32.totalorder %s23, 0
      %p197 = por %p195, %p196
      %s198 = ssub.s32 %s17, %s24
      %p199 = scmp.eq.s32.totalorder %s198, 0
      %s201 = sadd.s32 %s200, 1
      %s202 = scalar_select %p199, %s200, %s201
      %p205 = pneg %p199
      %p206 = scmp.eq.s32.totalorder %s17, 1
      %p207 = por %p205, %p206
      %p208 = scmp.ne.s32.totalorder %s200, %s203
      %p209 = scmp.eq.s32.totalorder %s17, 0
      %p210 = por %p208, %p209
      %p211 = scmp.ne.s32.totalorder %s200, %s203
      %p212 = scmp.eq.s32.totalorder %s22, 1
      %p213 = por %p211, %p212
      %p214 = scmp.ne.s32.totalorder %s203, %s204
      %p215 = scmp.eq.s32.totalorder %s22, 0
      %p216 = por %p214, %p215
      %p217 = scmp.ne.s32.totalorder %s203, %s204
      %p218 = scmp.eq.s32.totalorder %s23, 1
      %p219 = por %p217, %p218
      %p221 = scmp.ne.s32.totalorder %s204, %s220
      %p222 = scmp.eq.s32.totalorder %s23, 0
      %p223 = por %p221, %p222
      %p224 = scmp.le.s32.totalorder 1, %s17
      %p225 = scmp.lt.s32.totalorder %s17, 3
      %p226 = pnand %p224, %p225
      %p227 = pneg %p226
      // Predicated region
      $region9: #{tpu_custom_call.1} parent=5 // pred_check
        _
      $region10: #{tpu_custom_call.1} parent=5 // pred_check_branch
        %229 = sbr.rel (%p226) target = $region12
      $region11: #{tpu_custom_call.1} parent=5 // pred_region
        %s230 = ssub.s32 %s17, 1
        // Predicated region
        $region13: #{tpu_custom_call.1} parent=11 // pred_check
          %p231 = pneg %p64
        $region14: #{tpu_custom_call.1} parent=11 // pred_check_branch
          %233 = sbr.rel (%p231) target = $region16
        $region15: #{tpu_custom_call.1} parent=11 // pred_region
          _
        $region16: #{tpu_custom_call.1} parent=11 // pred_fallthru
          _
        // Predicated region
        $region17: #{tpu_custom_call.1} parent=11 // pred_check
          %p234 = pneg %p85
        $region18: #{tpu_custom_call.1} parent=11 // pred_check_branch
          %236 = sbr.rel (%p234) target = $region20
        $region19: #{tpu_custom_call.1} parent=11 // pred_region
          _
        $region20: #{tpu_custom_call.1} parent=11 // pred_fallthru
          _
        // Predicated region
        $region21: #{tpu_custom_call.1} parent=11 // pred_check
          %p237 = pneg %p106
        $region22: #{tpu_custom_call.1} parent=11 // pred_check_branch
          %239 = sbr.rel (%p237) target = $region24
        $region23: #{tpu_custom_call.1} parent=11 // pred_region
          _
        $region24: #{tpu_custom_call.1} parent=11 // pred_fallthru
          _
        // Predicated region
        $region25: #{tpu_custom_call.1} parent=11 // pred_check
          %p240 = pneg %p127
        $region26: #{tpu_custom_call.1} parent=11 // pred_check_branch
          %242 = sbr.rel (%p240) target = $region28
        $region27: #{tpu_custom_call.1} parent=11 // pred_region
          _
        $region28: #{tpu_custom_call.1} parent=11 // pred_fallthru
          _
        // Predicated region
        $region29: #{tpu_custom_call.1} parent=11 // pred_check
          %p243 = pneg %p148
        $region30: #{tpu_custom_call.1} parent=11 // pred_check_branch
          %245 = sbr.rel (%p243) target = $region32
        $region31: #{tpu_custom_call.1} parent=11 // pred_region
          _
        $region32: #{tpu_custom_call.1} parent=11 // pred_fallthru
          _
        // Predicated region
        $region33: #{tpu_custom_call.1} parent=11 // pred_check
          %p246 = pneg %p169
        $region34: #{tpu_custom_call.1} parent=11 // pred_check_branch
          %248 = sbr.rel (%p246) target = $region36
        $region35: #{tpu_custom_call.1} parent=11 // pred_region
          _
        $region36: #{tpu_custom_call.1} parent=11 // pred_fallthru
          _
        // Predicated region
        $region37: #{tpu_custom_call.1} parent=11 // pred_check
          %p249 = pneg %p190
        $region38: #{tpu_custom_call.1} parent=11 // pred_check_branch
          %251 = sbr.rel (%p249) target = $region40
        $region39: #{tpu_custom_call.1} parent=11 // pred_region
          _
        $region40: #{tpu_custom_call.1} parent=11 // pred_fallthru
          _
      $region12: #{tpu_custom_call.1} parent=5 // pred_fallthru
        _
      %p252 = scmp.lt.s32.totalorder %s17, 2
      // Predicated region
      $region41: #{tpu_custom_call.1} parent=5 // pred_check
        %p253 = pneg %p252
      $region42: #{tpu_custom_call.1} parent=5 // pred_check_branch
        %255 = sbr.rel (%p253) target = $region44
      $region43: #{tpu_custom_call.1} parent=5 // pred_region
        // Predicated region
        $region45: #{tpu_custom_call.1} parent=43 // pred_check
          %p256 = pneg %p37
        $region46: #{tpu_custom_call.1} parent=43 // pred_check_branch
          %258 = sbr.rel (%p256) target = $region48
        $region47: #{tpu_custom_call.1} parent=43 // pred_region
          %s259 = smul.u32 2, %s17
          %p260 = scmp.lt.s32.totalorder %s259, 3
          %s261 = scalar_select %p260, %s259, 3
          %s262 = smul.addr %s261, 8
          %s263 = scalar_lea.vmem %s0, %s262
          %s264 = smul.u32 2, %s17
        $region48: #{tpu_custom_call.1} parent=43 // pred_fallthru
          _
      $region44: #{tpu_custom_call.1} parent=5 // pred_fallthru
        _
      %p265 = scmp.le.s32.totalorder 1, %s17
      %p266 = scmp.lt.s32.totalorder %s17, 3
      %p267 = pnand %p265, %p266
      %p268 = pneg %p267
      // Predicated region
      $region49: #{tpu_custom_call.1} parent=5 // pred_check
        _
      $region50: #{tpu_custom_call.1} parent=5 // pred_check_branch
        %270 = sbr.rel (%p267) target = $region52
      $region51: #{tpu_custom_call.1} parent=5 // pred_region
        %s271 = ssub.s32 %s17, 1
        %s272 = smul.u32 2, %s22
        %p273 = scmp.lt.s32.totalorder %s272, 3
        %s274 = scalar_select %p273, %s272, 3
        %s275 = smul.addr %s274, 8
        %s276 = scalar_lea.vmem %s0, %s275
        %p277 = pneg %p43
        %p278 = pneg %p40
        %p279 = pneg %p64
        %p280 = pneg %p61
        %p281 = pneg %p85
        %p282 = pneg %p82
        %p283 = pneg %p106
        %p284 = pneg %p103
        %p285 = pneg %p127
        %p286 = pneg %p124
        %p287 = pneg %p148
        %p288 = pneg %p145
        %p289 = pneg %p169
        %p290 = pneg %p166
        %p291 = pneg %p190
        %p292 = pneg %p187
        %p293 = pneg %p216
        %p294 = pneg %p213
        %s295 = sand.u32 %s203, 1
        %s296 = scalar_lea.sflag [#allocation3], %s295
        %s297 = sand.u32 %s203, 1
        %s298 = smul.addr %s297, 32
        %s299 = scalar_lea.vmem [#allocation2], %s298
        %s300 = smul.u32 2, %s22
        %p301 = scmp.lt.s32.totalorder %s300, 3
        %s302 = scalar_select %p301, %s300, 3
        %s303 = smul.addr %s302, 8
        %s304 = scalar_lea.vmem %s0, %s303
        %s305 = smul.u32 2, %s22
        %s306 = smul.u32 2, %s22
        %v308 = vld [vmem:[%s1] sm:$0xf]
        %v309 = vld [vmem:[%s1 + $0x4] sm:$0xf]
        %v310 = vld [vmem:[%s1 + $0x8] sm:$0xf]
        %v311 = vld [vmem:[%s1 + $0xc] sm:$0xf]
        %v312 = vld [vmem:[%s2] sm:$0xff]
        %v313 = vld [vmem:[%s2 + $0x8] sm:$0xff]
        %v314 = vld [vmem:[%s2 + $0x10] sm:$0xff]
        %v315 = vld [vmem:[%s2 + $0x18] sm:$0xff]
        %v316 = vld [vmem:[%s3] sm:$0xf]
        %v317 = vld [vmem:[%s3 + $0x4] sm:$0xf]
        %v318 = vld [vmem:[%s4] sm:$0xff]
        %v319 = vld [vmem:[%s4 + $0x8] sm:$0xff]
        %v320 = vld [vmem:[%s5] sm:$0xf]
        %v321 = vld [vmem:[%s5 + $0x4] sm:$0xf]
        %v322 = vld [vmem:[%s6] sm:$0xff]
        %v323 = vld [vmem:[%s6 + $0x8] sm:$0xff]
        %v324 = vld [vmem:[%s7] sm:$0xf]
        %v325 = vld [vmem:[%s7 + $0x4] sm:$0xf]
        %v326 = vld [vmem:[%s304] sm:$0xff]
        %v327 = vpack.c.bf16 %v326, %v326
        %329 = vset.pattern.permute.xlu0 0
        %330 = vperm.xlu0 %329, %v312
        %v331 = vpop.permute.xlu0 %330
        %334 = vset.pattern.permute.xlu0 0
        %335 = vperm.xlu0 %334, %v313
        %v336 = vpop.permute.xlu0 %335
        %339 = vset.pattern.permute.xlu0 0
        %340 = vperm.xlu0 %339, %v314
        %v341 = vpop.permute.xlu0 %340
        %344 = vset.pattern.permute.xlu0 0
        %345 = vperm.xlu0 %344, %v315
        %v346 = vpop.permute.xlu0 %345
        %v352 = vunpack.c.l.b16 %v308
        %v353 = vunpack.c.l.b16 %v309
        %v354 = vunpack.c.l.b16 %v310
        %v355 = vunpack.c.l.b16 %v311
        %v356 = vpack.c.b16 %v353, %v352
        %v357 = vpack.c.b16 %v355, %v354
        %vm358 = vcmask 64512
        %v360 = vsel %vm358, %v356, 0
        %v363 = vsel %vm358, %v357, 0
        %vm365 = vcmask 1043456
        %v367 = vsel %vm365, %v327, 0
        %369 = vmatprep.subr.bf16.mxu0 0
        %370 = vmatpush1.bf16.msra.mxu0 %v367
        %371 = vmatprep.subr.bf16.mxu0 0
        %372 = vmatpush1.bf16.msra.mxu0 0
        %373 = vmatprep.subr.bf16.mxu0 0
        %374 = vmatpush1.bf16.msra.mxu0 0
        %375 = vmatprep.subr.bf16.mxu0 0
        %376 = vmatpush1.bf16.msra.mxu0 0
        %377 = vmatprep.subr.bf16.mxu0 0
        %378 = vmatpush1.bf16.msra.mxu0 0
        %379 = vmatprep.subr.bf16.mxu0 0
        %380 = vmatpush1.bf16.msra.mxu0 0
        %381 = vmatprep.subr.bf16.mxu0 0
        %382 = vmatpush1.bf16.msra.mxu0 0
        %383 = vmatprep.subr.bf16.mxu0 0
        %384 = vmatpush1.bf16.msra.mxu0 0
        %385 = vmatprep.subr.bf16.mxu0 0
        %386 = vmatpush1.bf16.msra.mxu0 0
        %387 = vmatprep.subr.bf16.mxu0 0
        %388 = vmatpush1.bf16.msra.mxu0 0
        %389 = vmatprep.subr.bf16.mxu0 0
        %390 = vmatpush1.bf16.msra.mxu0 0
        %391 = vmatprep.subr.bf16.mxu0 0
        %392 = vmatpush1.bf16.msra.mxu0 0
        %393 = vmatprep.subr.bf16.mxu0 0
        %394 = vmatpush1.bf16.msra.mxu0 0
        %395 = vmatprep.subr.bf16.mxu0 0
        %396 = vmatpush1.bf16.msra.mxu0 0
        %397 = vmatprep.subr.bf16.mxu0 0
        %398 = vmatpush1.bf16.msra.mxu0 0
        %399 = vmatprep.subr.bf16.mxu0 0
        %400 = vmatpush1.bf16.msra.mxu0 0
        %401 = vmatprep.mubr.bf16.mxu0 0
        %402 = vmatmul.mubr.bf16.gmra.mrb[0].mxu0 %v360
        %v403 = vpop.f32.mrb[0].mxu0
        %v404 = vadd.f32 %v331, %v403
        %v405 = vpop.f32.mrb[0].mxu0
        %v406 = vpop.f32.mrb[0].mxu0
        %v407 = vadd.f32 %v336, %v406
        %v408 = vpop.f32.mrb[0].mxu0
        %409 = vmatprep.mubr.bf16.mxu0 0
        %410 = vmatmul.mubr.bf16.gmra.mrb[0].mxu0 %v363
        %v411 = vpop.f32.mrb[0].mxu0
        %v412 = vadd.f32 %v341, %v411
        %v413 = vpop.f32.mrb[0].mxu0
        %v414 = vpop.f32.mrb[0].mxu0
        %v415 = vadd.f32 %v346, %v414
        %v416 = vpop.f32.mrb[0].mxu0
        %417 = vdwg.mxu0
        %v418 = vmax.f32 %v404, 0.0
        %v419 = vmax.f32 %v407, 0.0
        %v420 = vmax.f32 %v412, 0.0
        %v421 = vmax.f32 %v415, 0.0
        %v422 = vpack.c.bf16 %v419, %v418
        %v423 = vpack.c.bf16 %v421, %v420
        %425 = vset.pattern.permute.xlu0 0
        %426 = vperm.xlu0 %425, %v318
        %v427 = vpop.permute.xlu0 %426
        %430 = vset.pattern.permute.xlu0 0
        %431 = vperm.xlu0 %430, %v319
        %v432 = vpop.permute.xlu0 %431
        %v436 = vunpack.c.l.b16 %v316
        %v437 = vunpack.c.l.b16 %v317
        %v438 = vpack.c.b16 %v437, %v436
        %vm439 = vcmask 261120
        %v441 = vsel %vm439, %v438, 0
        %443 = vmatprep.subr.bf16.mxu0 0
        %444 = vmatpush1.bf16.msra.mxu0 %v422
        %445 = vmatprep.subr.bf16.mxu0 0
        %446 = vmatpush1.bf16.msra.mxu0 %v423
        %447 = vmatprep.subr.bf16.mxu0 0
        %448 = vmatpush1.bf16.msra.mxu0 0
        %449 = vmatprep.subr.bf16.mxu0 0
        %450 = vmatpush1.bf16.msra.mxu0 0
        %451 = vmatprep.subr.bf16.mxu0 0
        %452 = vmatpush1.bf16.msra.mxu0 0
        %453 = vmatprep.subr.bf16.mxu0 0
        %454 = vmatpush1.bf16.msra.mxu0 0
        %455 = vmatprep.subr.bf16.mxu0 0
        %456 = vmatpush1.bf16.msra.mxu0 0
        %457 = vmatprep.subr.bf16.mxu0 0
        %458 = vmatpush1.bf16.msra.mxu0 0
        %459 = vmatprep.subr.bf16.mxu0 0
        %460 = vmatpush1.bf16.msra.mxu0 0
        %461 = vmatprep.subr.bf16.mxu0 0
        %462 = vmatpush1.bf16.msra.mxu0 0
        %463 = vmatprep.subr.bf16.mxu0 0
        %464 = vmatpush1.bf16.msra.mxu0 0
        %465 = vmatprep.subr.bf16.mxu0 0
        %466 = vmatpush1.bf16.msra.mxu0 0
        %467 = vmatprep.subr.bf16.mxu0 0
        %468 = vmatpush1.bf16.msra.mxu0 0
        %469 = vmatprep.subr.bf16.mxu0 0
        %470 = vmatpush1.bf16.msra.mxu0 0
        %471 = vmatprep.subr.bf16.mxu0 0
        %472 = vmatpush1.bf16.msra.mxu0 0
        %473 = vmatprep.subr.bf16.mxu0 0
        %474 = vmatpush1.bf16.msra.mxu0 0
        %475 = vmatprep.mubr.bf16.mxu0 0
        %476 = vmatmul.mubr.bf16.gmra.mrb[0].mxu0 %v441
        %v477 = vpop.f32.mrb[0].mxu0
        %v478 = vadd.f32 %v427, %v477
        %v479 = vpop.f32.mrb[0].mxu0
        %v480 = vpop.f32.mrb[0].mxu0
        %v481 = vadd.f32 %v432, %v480
        %v482 = vpop.f32.mrb[0].mxu0
        %483 = vdwg.mxu0
        %v484 = vmax.f32 %v478, 0.0
        %v485 = vmax.f32 %v481, 0.0
        %v486 = vpack.c.bf16 %v485, %v484
        %488 = vset.pattern.permute.xlu0 0
        %489 = vperm.xlu0 %488, %v322
        %v490 = vpop.permute.xlu0 %489
        %493 = vset.pattern.permute.xlu0 0
        %494 = vperm.xlu0 %493, %v323
        %v495 = vpop.permute.xlu0 %494
        %v499 = vunpack.c.l.b16 %v320
        %v500 = vunpack.c.l.b16 %v321
        %v501 = vpack.c.b16 %v500, %v499
        %vm502 = vcmask 130048
        %v504 = vsel %vm502, %v501, 0
        %506 = vmatprep.subr.bf16.mxu0 0
        %507 = vmatpush1.bf16.msra.mxu0 %v486
        %508 = vmatprep.subr.bf16.mxu0 0
        %509 = vmatpush1.bf16.msra.mxu0 0
        %510 = vmatprep.subr.bf16.mxu0 0
        %511 = vmatpush1.bf16.msra.mxu0 0
        %512 = vmatprep.subr.bf16.mxu0 0
        %513 = vmatpush1.bf16.msra.mxu0 0
        %514 = vmatprep.subr.bf16.mxu0 0
        %515 = vmatpush1.bf16.msra.mxu0 0
        %516 = vmatprep.subr.bf16.mxu0 0
        %517 = vmatpush1.bf16.msra.mxu0 0
        %518 = vmatprep.subr.bf16.mxu0 0
        %519 = vmatpush1.bf16.msra.mxu0 0
        %520 = vmatprep.subr.bf16.mxu0 0
        %521 = vmatpush1.bf16.msra.mxu0 0
        %522 = vmatprep.subr.bf16.mxu0 0
        %523 = vmatpush1.bf16.msra.mxu0 0
        %524 = vmatprep.subr.bf16.mxu0 0
        %525 = vmatpush1.bf16.msra.mxu0 0
        %526 = vmatprep.subr.bf16.mxu0 0
        %527 = vmatpush1.bf16.msra.mxu0 0
        %528 = vmatprep.subr.bf16.mxu0 0
        %529 = vmatpush1.bf16.msra.mxu0 0
        %530 = vmatprep.subr.bf16.mxu0 0
        %531 = vmatpush1.bf16.msra.mxu0 0
        %532 = vmatprep.subr.bf16.mxu0 0
        %533 = vmatpush1.bf16.msra.mxu0 0
        %534 = vmatprep.subr.bf16.mxu0 0
        %535 = vmatpush1.bf16.msra.mxu0 0
        %536 = vmatprep.subr.bf16.mxu0 0
        %537 = vmatpush1.bf16.msra.mxu0 0
        %538 = vmatprep.mubr.bf16.mxu0 0
        %539 = vmatmul.mubr.bf16.gmra.mrb[0].mxu0 %v504
        %v540 = vpop.f32.mrb[0].mxu0
        %v541 = vadd.f32 %v490, %v540
        %v542 = vpop.f32.mrb[0].mxu0
        %v543 = vpop.f32.mrb[0].mxu0
        %v544 = vadd.f32 %v495, %v543
        %v545 = vpop.f32.mrb[0].mxu0
        %546 = vdwg.mxu0
        %v547 = vpack.c.bf16 %v407, %v404
        %v548 = vpack.c.bf16 %v415, %v412
        %v551 = vunpack.c.l.b16 %v324
        %v552 = vunpack.c.l.b16 %v325
        %v553 = vpack.c.b16 %v552, %v551
        %v555 = vsel %vm439, %v553, 0
        %557 = vmatprep.subr.bf16.mxu0 0
        %558 = vmatpush1.bf16.msra.mxu0 %v547
        %559 = vmatprep.subr.bf16.mxu0 0
        %560 = vmatpush1.bf16.msra.mxu0 %v548
        %561 = vmatprep.subr.bf16.mxu0 0
        %562 = vmatpush1.bf16.msra.mxu0 0
        %563 = vmatprep.subr.bf16.mxu0 0
        %564 = vmatpush1.bf16.msra.mxu0 0
        %565 = vmatprep.subr.bf16.mxu0 0
        %566 = vmatpush1.bf16.msra.mxu0 0
        %567 = vmatprep.subr.bf16.mxu0 0
        %568 = vmatpush1.bf16.msra.mxu0 0
        %569 = vmatprep.subr.bf16.mxu0 0
        %570 = vmatpush1.bf16.msra.mxu0 0
        %571 = vmatprep.subr.bf16.mxu0 0
        %572 = vmatpush1.bf16.msra.mxu0 0
        %573 = vmatprep.subr.bf16.mxu0 0
        %574 = vmatpush1.bf16.msra.mxu0 0
        %575 = vmatprep.subr.bf16.mxu0 0
        %576 = vmatpush1.bf16.msra.mxu0 0
        %577 = vmatprep.subr.bf16.mxu0 0
        %578 = vmatpush1.bf16.msra.mxu0 0
        %579 = vmatprep.subr.bf16.mxu0 0
        %580 = vmatpush1.bf16.msra.mxu0 0
        %581 = vmatprep.subr.bf16.mxu0 0
        %582 = vmatpush1.bf16.msra.mxu0 0
        %583 = vmatprep.subr.bf16.mxu0 0
        %584 = vmatpush1.bf16.msra.mxu0 0
        %585 = vmatprep.subr.bf16.mxu0 0
        %586 = vmatpush1.bf16.msra.mxu0 0
        %587 = vmatprep.subr.bf16.mxu0 0
        %588 = vmatpush1.bf16.msra.mxu0 0
        %589 = vmatprep.mubr.bf16.mxu0 0
        %590 = vmatmul.mubr.bf16.gmra.mrb[0].mxu0 %v555
        %v591 = vpop.f32.mrb[0].mxu0
        %v592 = vadd.f32 %v541, %v591
        %v593 = vpop.f32.mrb[0].mxu0
        %v594 = vpop.f32.mrb[0].mxu0
        %v595 = vadd.f32 %v544, %v594
        %v596 = vpop.f32.mrb[0].mxu0
        %597 = vdwg.mxu0
        %vm598 = vcmask 523264
        %599 = vst.msk [vmem:[%s299] sm:$0xff] %vm598, %v592
        %600 = vst.msk [vmem:[%s299 + $0x8] sm:$0xff] %vm598, %v595
        %s601 = scalar_lea.vmem %s304, 8
        %v602 = vld [vmem:[%s601] sm:$0xff]
        %v603 = vpack.c.bf16 %v602, %v602
        %v605 = vsel %vm365, %v603, 0
        %607 = vmatprep.subr.bf16.mxu0 0
        %608 = vmatpush1.bf16.msra.mxu0 %v605
        %609 = vmatprep.subr.bf16.mxu0 0
        %610 = vmatpush1.bf16.msra.mxu0 0
        %611 = vmatprep.subr.bf16.mxu0 0
        %612 = vmatpush1.bf16.msra.mxu0 0
        %613 = vmatprep.subr.bf16.mxu0 0
        %614 = vmatpush1.bf16.msra.mxu0 0
        %615 = vmatprep.subr.bf16.mxu0 0
        %616 = vmatpush1.bf16.msra.mxu0 0
        %617 = vmatprep.subr.bf16.mxu0 0
        %618 = vmatpush1.bf16.msra.mxu0 0
        %619 = vmatprep.subr.bf16.mxu0 0
        %620 = vmatpush1.bf16.msra.mxu0 0
        %621 = vmatprep.subr.bf16.mxu0 0
        %622 = vmatpush1.bf16.msra.mxu0 0
        %623 = vmatprep.subr.bf16.mxu0 0
        %624 = vmatpush1.bf16.msra.mxu0 0
        %625 = vmatprep.subr.bf16.mxu0 0
        %626 = vmatpush1.bf16.msra.mxu0 0
        %627 = vmatprep.subr.bf16.mxu0 0
        %628 = vmatpush1.bf16.msra.mxu0 0
        %629 = vmatprep.subr.bf16.mxu0 0
        %630 = vmatpush1.bf16.msra.mxu0 0
        %631 = vmatprep.subr.bf16.mxu0 0
        %632 = vmatpush1.bf16.msra.mxu0 0
        %633 = vmatprep.subr.bf16.mxu0 0
        %634 = vmatpush1.bf16.msra.mxu0 0
        %635 = vmatprep.subr.bf16.mxu0 0
        %636 = vmatpush1.bf16.msra.mxu0 0
        %637 = vmatprep.subr.bf16.mxu0 0
        %638 = vmatpush1.bf16.msra.mxu0 0
        %639 = vmatprep.mubr.bf16.mxu0 0
        %640 = vmatmul.mubr.bf16.gmra.mrb[0].mxu0 %v360
        %v641 = vpop.f32.mrb[0].mxu0
        %v642 = vadd.f32 %v331, %v641
        %v643 = vpop.f32.mrb[0].mxu0
        %v644 = vpop.f32.mrb[0].mxu0
        %v645 = vadd.f32 %v336, %v644
        %v646 = vpop.f32.mrb[0].mxu0
        %647 = vmatprep.mubr.bf16.mxu0 0
        %648 = vmatmul.mubr.bf16.gmra.mrb[0].mxu0 %v363
        %v649 = vpop.f32.mrb[0].mxu0
        %v650 = vadd.f32 %v341, %v649
        %v651 = vpop.f32.mrb[0].mxu0
        %v652 = vpop.f32.mrb[0].mxu0
        %v653 = vadd.f32 %v346, %v652
        %v654 = vpop.f32.mrb[0].mxu0
        %655 = vdwg.mxu0
        %v656 = vmax.f32 %v642, 0.0
        %v657 = vmax.f32 %v645, 0.0
        %v658 = vmax.f32 %v650, 0.0
        %v659 = vmax.f32 %v653, 0.0
        %v660 = vpack.c.bf16 %v657, %v656
        %v661 = vpack.c.bf16 %v659, %v658
        %662 = vmatprep.subr.bf16.mxu0 0
        %663 = vmatpush1.bf16.msra.mxu0 %v660
        %664 = vmatprep.subr.bf16.mxu0 0
        %665 = vmatpush1.bf16.msra.mxu0 %v661
        %666 = vmatprep.subr.bf16.mxu0 0
        %667 = vmatpush1.bf16.msra.mxu0 0
        %668 = vmatprep.subr.bf16.mxu0 0
        %669 = vmatpush1.bf16.msra.mxu0 0
        %670 = vmatprep.subr.bf16.mxu0 0
        %671 = vmatpush1.bf16.msra.mxu0 0
        %672 = vmatprep.subr.bf16.mxu0 0
        %673 = vmatpush1.bf16.msra.mxu0 0
        %674 = vmatprep.subr.bf16.mxu0 0
        %675 = vmatpush1.bf16.msra.mxu0 0
        %676 = vmatprep.subr.bf16.mxu0 0
        %677 = vmatpush1.bf16.msra.mxu0 0
        %678 = vmatprep.subr.bf16.mxu0 0
        %679 = vmatpush1.bf16.msra.mxu0 0
        %680 = vmatprep.subr.bf16.mxu0 0
        %681 = vmatpush1.bf16.msra.mxu0 0
        %682 = vmatprep.subr.bf16.mxu0 0
        %683 = vmatpush1.bf16.msra.mxu0 0
        %684 = vmatprep.subr.bf16.mxu0 0
        %685 = vmatpush1.bf16.msra.mxu0 0
        %686 = vmatprep.subr.bf16.mxu0 0
        %687 = vmatpush1.bf16.msra.mxu0 0
        %688 = vmatprep.subr.bf16.mxu0 0
        %689 = vmatpush1.bf16.msra.mxu0 0
        %690 = vmatprep.subr.bf16.mxu0 0
        %691 = vmatpush1.bf16.msra.mxu0 0
        %692 = vmatprep.subr.bf16.mxu0 0
        %693 = vmatpush1.bf16.msra.mxu0 0
        %694 = vmatprep.mubr.bf16.mxu0 0
        %695 = vmatmul.mubr.bf16.gmra.mrb[0].mxu0 %v441
        %v696 = vpop.f32.mrb[0].mxu0
        %v697 = vadd.f32 %v427, %v696
        %v698 = vpop.f32.mrb[0].mxu0
        %v699 = vpop.f32.mrb[0].mxu0
        %v700 = vadd.f32 %v432, %v699
        %v701 = vpop.f32.mrb[0].mxu0
        %702 = vdwg.mxu0
        %v703 = vmax.f32 %v697, 0.0
        %v704 = vmax.f32 %v700, 0.0
        %v705 = vpack.c.bf16 %v704, %v703
        %706 = vmatprep.subr.bf16.mxu0 0
        %707 = vmatpush1.bf16.msra.mxu0 %v705
        %708 = vmatprep.subr.bf16.mxu0 0
        %709 = vmatpush1.bf16.msra.mxu0 0
        %710 = vmatprep.subr.bf16.mxu0 0
        %711 = vmatpush1.bf16.msra.mxu0 0
        %712 = vmatprep.subr.bf16.mxu0 0
        %713 = vmatpush1.bf16.msra.mxu0 0
        %714 = vmatprep.subr.bf16.mxu0 0
        %715 = vmatpush1.bf16.msra.mxu0 0
        %716 = vmatprep.subr.bf16.mxu0 0
        %717 = vmatpush1.bf16.msra.mxu0 0
        %718 = vmatprep.subr.bf16.mxu0 0
        %719 = vmatpush1.bf16.msra.mxu0 0
        %720 = vmatprep.subr.bf16.mxu0 0
        %721 = vmatpush1.bf16.msra.mxu0 0
        %722 = vmatprep.subr.bf16.mxu0 0
        %723 = vmatpush1.bf16.msra.mxu0 0
        %724 = vmatprep.subr.bf16.mxu0 0
        %725 = vmatpush1.bf16.msra.mxu0 0
        %726 = vmatprep.subr.bf16.mxu0 0
        %727 = vmatpush1.bf16.msra.mxu0 0
        %728 = vmatprep.subr.bf16.mxu0 0
        %729 = vmatpush1.bf16.msra.mxu0 0
        %730 = vmatprep.subr.bf16.mxu0 0
        %731 = vmatpush1.bf16.msra.mxu0 0
        %732 = vmatprep.subr.bf16.mxu0 0
        %733 = vmatpush1.bf16.msra.mxu0 0
        %734 = vmatprep.subr.bf16.mxu0 0
        %735 = vmatpush1.bf16.msra.mxu0 0
        %736 = vmatprep.subr.bf16.mxu0 0
        %737 = vmatpush1.bf16.msra.mxu0 0
        %738 = vmatprep.mubr.bf16.mxu0 0
        %739 = vmatmul.mubr.bf16.gmra.mrb[0].mxu0 %v504
        %v740 = vpop.f32.mrb[0].mxu0
        %v741 = vadd.f32 %v490, %v740
        %v742 = vpop.f32.mrb[0].mxu0
        %v743 = vpop.f32.mrb[0].mxu0
        %v744 = vadd.f32 %v495, %v743
        %v745 = vpop.f32.mrb[0].mxu0
        %746 = vdwg.mxu0
        %v747 = vpack.c.bf16 %v645, %v642
        %v748 = vpack.c.bf16 %v653, %v650
        %749 = vmatprep.subr.bf16.mxu0 0
        %750 = vmatpush1.bf16.msra.mxu0 %v747
        %751 = vmatprep.subr.bf16.mxu0 0
        %752 = vmatpush1.bf16.msra.mxu0 %v748
        %753 = vmatprep.subr.bf16.mxu0 0
        %754 = vmatpush1.bf16.msra.mxu0 0
        %755 = vmatprep.subr.bf16.mxu0 0
        %756 = vmatpush1.bf16.msra.mxu0 0
        %757 = vmatprep.subr.bf16.mxu0 0
        %758 = vmatpush1.bf16.msra.mxu0 0
        %759 = vmatprep.subr.bf16.mxu0 0
        %760 = vmatpush1.bf16.msra.mxu0 0
        %761 = vmatprep.subr.bf16.mxu0 0
        %762 = vmatpush1.bf16.msra.mxu0 0
        %763 = vmatprep.subr.bf16.mxu0 0
        %764 = vmatpush1.bf16.msra.mxu0 0
        %765 = vmatprep.subr.bf16.mxu0 0
        %766 = vmatpush1.bf16.msra.mxu0 0
        %767 = vmatprep.subr.bf16.mxu0 0
        %768 = vmatpush1.bf16.msra.mxu0 0
        %769 = vmatprep.subr.bf16.mxu0 0
        %770 = vmatpush1.bf16.msra.mxu0 0
        %771 = vmatprep.subr.bf16.mxu0 0
        %772 = vmatpush1.bf16.msra.mxu0 0
        %773 = vmatprep.subr.bf16.mxu0 0
        %774 = vmatpush1.bf16.msra.mxu0 0
        %775 = vmatprep.subr.bf16.mxu0 0
        %776 = vmatpush1.bf16.msra.mxu0 0
        %777 = vmatprep.subr.bf16.mxu0 0
        %778 = vmatpush1.bf16.msra.mxu0 0
        %779 = vmatprep.subr.bf16.mxu0 0
        %780 = vmatpush1.bf16.msra.mxu0 0
        %781 = vmatprep.mubr.bf16.mxu0 0
        %782 = vmatmul.mubr.bf16.gmra.mrb[0].mxu0 %v555
        %v783 = vpop.f32.mrb[0].mxu0
        %v784 = vadd.f32 %v741, %v783
        %v785 = vpop.f32.mrb[0].mxu0
        %v786 = vpop.f32.mrb[0].mxu0
        %v787 = vadd.f32 %v744, %v786
        %v788 = vpop.f32.mrb[0].mxu0
        %789 = vdwg.mxu0
        %s790 = scalar_lea.vmem %s299, 16 [#allocation2]
        %791 = vst.msk [vmem:[%s790] sm:$0xff] %vm598, %v784
        %792 = vst.msk [vmem:[%s790 + $0x8] sm:$0xff] %vm598, %v787
        %s793 = sand.u32 %s203, 1
        %s794 = scalar_lea.sflag [#allocation3], %s793
        %s795 = sand.u32 %s203, 1
        %s796 = smul.addr %s795, 32
        %s797 = scalar_lea.vmem [#allocation2], %s796
        // Predicated region
        $region53: #{tpu_custom_call.1} parent=51 // pred_check
          %p798 = pneg %p213
        $region54: #{tpu_custom_call.1} parent=51 // pred_check_branch
          %800 = sbr.rel (%p798) target = $region56
        $region55: #{tpu_custom_call.1} parent=51 // pred_region
          %s801 = smul.u32 2, %s22
          %s803 = ssub.s32 512, 512
          %804 = vsyncadd %s794, %s803
          %s805 = smul.addr %s801, 2
          %s806 = smul.addr %s805, 128
          %s807 = scalar_lea.hbm %s8, %s806
          %s808 = sshll.u32 %s797, 4
          %s809 = int_to_ptr.vmem [resolvable:$true] %s808
          %814 = dma.vmem_to_hbm [thread:$0]  %s809, 512, %s807, %s794, 128, 128, 8
        $region56: #{tpu_custom_call.1} parent=51 // pred_fallthru
          _
      $region52: #{tpu_custom_call.1} parent=5 // pred_fallthru
        _
      %p815 = scmp.le.s32.totalorder 2, %s17
      // Predicated region
      $region57: #{tpu_custom_call.1} parent=5 // pred_check
        %p816 = pneg %p815
      $region58: #{tpu_custom_call.1} parent=5 // pred_check_branch
        %818 = sbr.rel (%p816) target = $region60
      $region59: #{tpu_custom_call.1} parent=5 // pred_region
        %s819 = ssub.s32 %s17, 2
        // Predicated region
        $region61: #{tpu_custom_call.1} parent=59 // pred_check
          %p820 = pneg %p219
        $region62: #{tpu_custom_call.1} parent=59 // pred_check_branch
          %822 = sbr.rel (%p820) target = $region64
        $region63: #{tpu_custom_call.1} parent=59 // pred_region
          %s823 = sand.u32 %s204, 1
          %s824 = scalar_lea.sflag [#allocation3], %s823
          %s825 = sand.u32 %s204, 1
          %s826 = smul.addr %s825, 32
          %s827 = scalar_lea.vmem [#allocation2], %s826
          %828 = dma.done %s824, 512
        $region64: #{tpu_custom_call.1} parent=59 // pred_fallthru
          _
      $region60: #{tpu_custom_call.1} parent=5 // pred_fallthru
        _
    $region6: #{tpu_custom_call.1} parent=1 // loop_footer
      %s21 = sadd.s32 1, %s17
    $region7: #{tpu_custom_call.1} parent=1 // loop_footer_branch
      %16 = sbr.rel target = $region3
    $region8: #{tpu_custom_call.1} parent=1 // loop_exit
      _
    %829 = vsyncpa [#allocation3], 1
    %s830 = scalar_lea.sflag [#allocation3], 1
    %831 = vsyncpa %s830, 1

</llo_original>
